<compile_context>
chip_gen: v7x
topology: tpu7x:2x2x1
jax: 0.10.0
libtpu: 0.0.40
codegen_flags: <defaults>
</compile_context>

<pallas_src>
import functools

import jax
import jax.numpy as jnp
from jax.experimental import pallas as pl
from jax.experimental.pallas import tpu as pltpu


# ---------------------------------------------------------------------------
# Kernel
# ---------------------------------------------------------------------------
def _world_kernel(x_ref, w1_ref, w2_ref, w3_ref, b_ref, out_ref):
    """One batch-tile of the fused ensemble MLP.

    x_ref  : (TB, D_in)            f32  state tile (streamed per grid step)
    w1_ref : (D_in, E*H1)          bf16 concatenated layer-1 weights (dense)
    w2_ref : (E*H1, E*H2)          bf16 block-diagonal layer-2 weights
    w3_ref : (E*H2, E*D_out)       bf16 block-diagonal last-layer weights
    b_ref  : (1, E*(H1+H2+D_out))  f32  packed bias row
    out_ref: (TB, E*D_out)         f32  output slab tile
    """
    eh1 = w1_ref.shape[1]
    eh2 = w2_ref.shape[1]
    edo = w3_ref.shape[1]
    # Static lane slices of the packed bias row (128-aligned starts here).
    b1 = b_ref[:, 0:eh1]
    b2 = b_ref[:, eh1:eh1 + eh2]
    b3 = b_ref[:, eh1 + eh2:eh1 + eh2 + edo]

    # Layer 0: dense (no block-diag, no input tiling) -> bias -> ReLU.
    # MXU inputs bf16, f32 accumulation; bias-add / ReLU in f32.
    x = x_ref[...].astype(jnp.bfloat16)
    h = jnp.dot(x, w1_ref[...], preferred_element_type=jnp.float32) + b1
    h = jnp.maximum(h, 0.0)

    # Layer 1: block-diag ensemble matmul -> bias -> ReLU.
    # (Dropout is identity in eval mode; the reference's second ReLU after the
    #  Dropout is idempotent on already-ReLU'd activations.)
    h = jnp.dot(h.astype(jnp.bfloat16), w2_ref[...],
                preferred_element_type=jnp.float32) + b2
    h = jnp.maximum(h, 0.0)

    # Last layer: block-diag ensemble matmul, no activation.
    # E*D_out = 64 (< 128 lanes) -> masked store; acceptable at this size.
    out_ref[...] = (jnp.dot(h.astype(jnp.bfloat16), w3_ref[...],
                            preferred_element_type=jnp.float32) + b3)


# ---------------------------------------------------------------------------
# One-time parameter packing (hoisted out of the hot path)
# ---------------------------------------------------------------------------
def _block_diag(w):
    """(E, K, N) ensemble weights -> (E*K, E*N) block-diagonal matrix."""
    E, K, N = w.shape
    eye = jnp.eye(E, dtype=w.dtype)
    return jnp.einsum("ekn,ef->ekfn", w, eye).reshape(E * K, E * N)


def pack_world_params(params):
    """Pack ensemble weights once. Weights -> bf16 (MXU inputs), biases -> f32."""
    w1, b1 = params["w1"], params["b1"]
    w2, b2 = params["w2"], params["b2"]
    w3, b3 = params["w3"], params["b3"]
    E, D_in, H1 = w1.shape
    H2 = w2.shape[2]
    D_out = w3.shape[2]

    # Layer 1 is shared-input: concatenate member weights along output lanes.
    w1_cat = jnp.transpose(w1, (1, 0, 2)).reshape(D_in, E * H1).astype(jnp.bfloat16)
    w2_bd = _block_diag(w2).astype(jnp.bfloat16)          # (E*H1, E*H2)
    w3_bd = _block_diag(w3).astype(jnp.bfloat16)          # (E*H2, E*D_out)
    b_all = jnp.concatenate(
        [b1.reshape(1, E * H1), b2.reshape(1, E * H2), b3.reshape(1, E * D_out)],
        axis=1).astype(jnp.float32)
    return (w1_cat, w2_bd, w3_bd, b_all)


# ---------------------------------------------------------------------------
# Forward
# ---------------------------------------------------------------------------
@functools.partial(jax.jit, static_argnames=("ensemble_size",))
def deterministic_world_forward(state, packed, *, ensemble_size):
    """state: (B, D_in) f32. packed: output of pack_world_params.
    Returns (E, B, D_out) f32 — same layout as the PyTorch module's output."""
    w1_cat, w2_bd, w3_bd, b_all = packed
    B, D_in = state.shape
    EH1 = w1_cat.shape[1]
    EH2 = w2_bd.shape[1]
    EDO = w3_bd.shape[1]
    E = ensemble_size
    D_out = EDO // E

    # Batch tiling: stream B in 128-row tiles; weights stay VMEM-resident
    # (constant block index) across the whole grid.
    TB = 128 if B % 128 == 0 else B
    grid = (B // TB,)

    out_slab = pl.pallas_call(
        _world_kernel,
        out_shape=jax.ShapeDtypeStruct((B, EDO), jnp.float32),
        grid_spec=pltpu.PrefetchScalarGridSpec(
            num_scalar_prefetch=0,
            grid=grid,
            in_specs=[
                pl.BlockSpec((TB, D_in), lambda i: (i, 0)),   # streamed state
                pl.BlockSpec((D_in, EH1), lambda i: (0, 0)),  # resident weights
                pl.BlockSpec((EH1, EH2), lambda i: (0, 0)),
                pl.BlockSpec((EH2, EDO), lambda i: (0, 0)),
                pl.BlockSpec((1, EH1 + EH2 + EDO), lambda i: (0, 0)),
            ],
            out_specs=pl.BlockSpec((TB, EDO), lambda i: (i, 0)),
        ),
        compiler_params=pltpu.CompilerParams(
            dimension_semantics=("parallel",)),
    )(state, w1_cat, w2_bd, w3_bd, b_all)

    # (B, E*D_out) slab -> (E, B, D_out) to match the module contract.
    # TODO(synk): drop this transpose if the consumer accepts the lane-dense slab.
    return out_slab.reshape(B, E, D_out).transpose(1, 0, 2)


# ---------------------------------------------------------------------------
# Init + references
# ---------------------------------------------------------------------------
def init_ensemble_fc(key, ensemble_size, in_features, out_features):
    """Matches init_weights: truncated normal (±2 std), std = 1/(2*sqrt(in)),
    bias = 0."""
    std = 1.0 / (2.0 * jnp.sqrt(jnp.float32(in_features)))
    w = jax.random.truncated_normal(
        key, -2.0, 2.0, (ensemble_size, in_features, out_features),
        dtype=jnp.float32) * std
    b = jnp.zeros((ensemble_size, out_features), dtype=jnp.float32)
    return w, b


def reference_forward(state, params, cast_bf16=False):
    """Pure-JAX reference replicating the PyTorch forward (eval mode).
    cast_bf16=True mirrors the kernel's bf16-input / f32-accumulate dots."""
    E = params["w1"].shape[0]

    def fc(x, w, b):
        if cast_bf16:
            x = x.astype(jnp.bfloat16)
            w = w.astype(jnp.bfloat16)
        return (jnp.einsum("ebi,eio->ebo", x, w,
                           preferred_element_type=jnp.float32)
                + b[:, None, :])

    x = jnp.broadcast_to(state[None], (E,) + state.shape)          # repeat
    x = jnp.maximum(fc(x, params["w1"], params["b1"]), 0.0)
    x = jnp.maximum(fc(x, params["w2"], params["b2"]), 0.0)
    return fc(x, params["w3"], params["b3"])


if __name__ == "__main__":
    # Shapes consistent with DeterministicWorld(input_dim=32, output_dim=16,
    # network_dim=4, hidden_dim=(32, 32)); batch large enough to exercise the
    # batch-tile grid (2 tiles of 128).
    E = 4            # network_dim (ensemble size)
    B = 256          # batch (e.g. planning candidates)
    D_in = 32        # input_dim
    H1, H2 = 32, 32  # hidden_dim
    D_out = 16       # output_dim

    key = jax.random.PRNGKey(0)
    k_state, k1, k2, k3 = jax.random.split(key, 4)

    state = jax.random.normal(k_state, (B, D_in), dtype=jnp.float32)

    w1, b1 = init_ensemble_fc(k1, E, D_in, H1)
    w2, b2 = init_ensemble_fc(k2, E, H1, H2)
    w3, b3 = init_ensemble_fc(k3, E, H2, D_out)
    params = {"w1": w1, "b1": b1, "w2": w2, "b2": b2, "w3": w3, "b3": b3}

    # One-time packing (outside the per-forward hot path).
    packed = jax.tree_util.tree_map(jax.block_until_ready,
                                    pack_world_params(params))

    out = deterministic_world_forward(state, packed, ensemble_size=E)
    out = jax.block_until_ready(out)
    assert out.shape == (E, B, D_out)

    # Check against a bf16-input / f32-accumulate reference (tight) and the
    # full-f32 reference (loose, covers bf16 rounding of the MXU inputs).
    ref_bf16 = reference_forward(state, params, cast_bf16=True)
    ref_f32 = reference_forward(state, params, cast_bf16=False)
    assert jnp.allclose(out, ref_bf16, atol=5e-3, rtol=5e-3), \
        "mismatch vs bf16-matched reference"
    assert jnp.allclose(out, ref_f32, atol=5e-2, rtol=5e-2), \
        "mismatch vs f32 reference"

    print("KERNEL_OK")
</pallas_src>

<mosaic_0001>
module attributes {stable_mosaic.version = 11 : i64} {
  func.func @_world_kernel(%arg0: i32, %arg1: memref<128x32xf32, #tpu.memory_space<vmem>>, %arg2: memref<32x128xbf16, #tpu.memory_space<vmem>>, %arg3: memref<128x128xbf16, #tpu.memory_space<vmem>>, %arg4: memref<128x64xbf16, #tpu.memory_space<vmem>>, %arg5: memref<1x320xf32, #tpu.memory_space<vmem>>, %arg6: memref<128x64xf32, #tpu.memory_space<vmem>>) attributes {dimension_semantics = [#tpu.dimension_semantics<parallel>], iteration_bounds = array<i64: 2>, scalar_prefetch = 0 : i64, scratch_operands = 0 : i64, tpu.core_type = #tpu.core_type<tc>, window_params = [{transform_indices = @transform_0, window_bounds = array<i64: 128, 32>}, {pipeline_mode = #tpu.pipeline_mode<synchronous>, transform_indices = @transform_1, window_bounds = array<i64: 32, 128>}, {pipeline_mode = #tpu.pipeline_mode<synchronous>, transform_indices = @transform_2, window_bounds = array<i64: 128, 128>}, {pipeline_mode = #tpu.pipeline_mode<synchronous>, transform_indices = @transform_3, window_bounds = array<i64: 128, 64>}, {pipeline_mode = #tpu.pipeline_mode<synchronous>, transform_indices = @transform_4, window_bounds = array<i64: 1, 320>}, {transform_indices = @transform_5, window_bounds = array<i64: 128, 64>}]} {
    %c0 = arith.constant 0 : index
    %c0_0 = arith.constant 0 : index
    %0 = vector.load %arg5[%c0, %c0_0] : memref<1x320xf32, #tpu.memory_space<vmem>>, vector<1x128xf32>
    %c0_1 = arith.constant 0 : index
    %c128 = arith.constant 128 : index
    %1 = vector.load %arg5[%c0_1, %c128] : memref<1x320xf32, #tpu.memory_space<vmem>>, vector<1x128xf32>
    %c0_2 = arith.constant 0 : index
    %c256 = arith.constant 256 : index
    %2 = vector.load %arg5[%c0_2, %c256] : memref<1x320xf32, #tpu.memory_space<vmem>>, vector<1x64xf32>
    %c0_3 = arith.constant 0 : index
    %c0_4 = arith.constant 0 : index
    %3 = vector.load %arg1[%c0_3, %c0_4] : memref<128x32xf32, #tpu.memory_space<vmem>>, vector<128x32xf32>
    %4 = arith.truncf %3 : vector<128x32xf32> to vector<128x32xbf16>
    %c0_5 = arith.constant 0 : index
    %c0_6 = arith.constant 0 : index
    %5 = vector.load %arg2[%c0_5, %c0_6] : memref<32x128xbf16, #tpu.memory_space<vmem>>, vector<32x128xbf16>
    %cst = arith.constant dense<0.000000e+00> : vector<128x128xf32>
    %6 = tpu.matmul %4, %5, %cst {dimension_numbers = #tpu.dot_dimension_numbers<[1], [0], [0], [1], [0, 0, 1, 1], [], []>} : vector<128x32xbf16>, vector<32x128xbf16>, vector<128x128xf32> -> vector<128x128xf32>
    %7 = vector.broadcast %0 : vector<1x128xf32> to vector<128x128xf32>
    %8 = arith.addf %6, %7 : vector<128x128xf32>
    %cst_7 = arith.constant 0.000000e+00 : f32
    %9 = vector.broadcast %cst_7 : f32 to vector<128x128xf32>
    %10 = arith.maximumf %8, %9 : vector<128x128xf32>
    %11 = arith.truncf %10 : vector<128x128xf32> to vector<128x128xbf16>
    %c0_8 = arith.constant 0 : index
    %c0_9 = arith.constant 0 : index
    %12 = vector.load %arg3[%c0_8, %c0_9] : memref<128x128xbf16, #tpu.memory_space<vmem>>, vector<128x128xbf16>
    %cst_10 = arith.constant dense<0.000000e+00> : vector<128x128xf32>
    %13 = tpu.matmul %11, %12, %cst_10 {dimension_numbers = #tpu.dot_dimension_numbers<[1], [0], [0], [1], [0, 0, 1, 1], [], []>} : vector<128x128xbf16>, vector<128x128xbf16>, vector<128x128xf32> -> vector<128x128xf32>
    %14 = vector.broadcast %1 : vector<1x128xf32> to vector<128x128xf32>
    %15 = arith.addf %13, %14 : vector<128x128xf32>
    %cst_11 = arith.constant 0.000000e+00 : f32
    %16 = vector.broadcast %cst_11 : f32 to vector<128x128xf32>
    %17 = arith.maximumf %15, %16 : vector<128x128xf32>
    %18 = arith.truncf %17 : vector<128x128xf32> to vector<128x128xbf16>
    %c0_12 = arith.constant 0 : index
    %c0_13 = arith.constant 0 : index
    %19 = vector.load %arg4[%c0_12, %c0_13] : memref<128x64xbf16, #tpu.memory_space<vmem>>, vector<128x64xbf16>
    %cst_14 = arith.constant dense<0.000000e+00> : vector<128x64xf32>
    %20 = tpu.matmul %18, %19, %cst_14 {dimension_numbers = #tpu.dot_dimension_numbers<[1], [0], [0], [1], [0, 0, 1, 1], [], []>} : vector<128x128xbf16>, vector<128x64xbf16>, vector<128x64xf32> -> vector<128x64xf32>
    %21 = vector.broadcast %2 : vector<1x64xf32> to vector<128x64xf32>
    %22 = arith.addf %20, %21 : vector<128x64xf32>
    %c0_15 = arith.constant 0 : index
    %c0_16 = arith.constant 0 : index
    %23 = vector.load %arg6[%c0_15, %c0_16] : memref<128x64xf32, #tpu.memory_space<vmem>>, vector<128x64xf32>
    tpu.vector_store %arg6[%c0_15, %c0_16], %22 {strides = array<i32>} : memref<128x64xf32, #tpu.memory_space<vmem>>, vector<128x64xf32>,
    return
  }
  func.func @transform_0(%arg0: i32) -> (i32, i32) {
    %c0_i32 = arith.constant 0 : i32
    %c0_i32_0 = arith.constant 0 : i32
    return %arg0, %c0_i32 : i32, i32
  }
  func.func @transform_1(%arg0: i32) -> (i32, i32) {
    %c0_i32 = arith.constant 0 : i32
    %c0_i32_0 = arith.constant 0 : i32
    %c0_i32_1 = arith.constant 0 : i32
    return %c0_i32, %c0_i32_0 : i32, i32
  }
  func.func @transform_2(%arg0: i32) -> (i32, i32) {
    %c0_i32 = arith.constant 0 : i32
    %c0_i32_0 = arith.constant 0 : i32
    %c0_i32_1 = arith.constant 0 : i32
    return %c0_i32, %c0_i32_0 : i32, i32
  }
  func.func @transform_3(%arg0: i32) -> (i32, i32) {
    %c0_i32 = arith.constant 0 : i32
    %c0_i32_0 = arith.constant 0 : i32
    %c0_i32_1 = arith.constant 0 : i32
    return %c0_i32, %c0_i32_0 : i32, i32
  }
  func.func @transform_4(%arg0: i32) -> (i32, i32) {
    %c0_i32 = arith.constant 0 : i32
    %c0_i32_0 = arith.constant 0 : i32
    %c0_i32_1 = arith.constant 0 : i32
    return %c0_i32, %c0_i32_0 : i32, i32
  }
  func.func @transform_5(%arg0: i32) -> (i32, i32) {
    %c0_i32 = arith.constant 0 : i32
    %c0_i32_0 = arith.constant 0 : i32
    return %arg0, %c0_i32 : i32, i32
  }
}

</mosaic_0001>

<llo_original>
// kernel: deterministic_world_forward.1
$region0: #{deterministic_world_forward.1}
  #allocation0 [shape = 'u32[]', space=smem, size = 0x4, offset = 0x4, fixed_abs, tag = 'smem constant byte address 0x4 - core index']
  #allocation1 [shape = 'u32[144,128]{1,0:T(1,128)}', space=vmem, size = 0x12000, scoped, tag = 'internal scratch']
  %s0 = inlined_call_operand.vmem [shape: f32[256,32], index: 0, kind: input, shape index: {}]
  %s1 = inlined_call_operand.vmem [shape: bf16[32,128], index: 1, kind: input, shape index: {}]
  %s2 = inlined_call_operand.vmem [shape: bf16[128,128], index: 2, kind: input, shape index: {}]
  %s3 = inlined_call_operand.vmem [shape: bf16[128,64], index: 3, kind: input, shape index: {}]
  %s4 = inlined_call_operand.vmem [shape: f32[1,320], index: 4, kind: input, shape index: {}]
  %s5 = inlined_call_operand.vmem [shape: f32[256,64], index: 5, kind: output, shape index: {}]
  %s6 = sld [smem:[#allocation0]]
  $region53: #{deterministic_world_forward.1} parent=0
    _
  %s8 = ssub.s32 1, %s6
  %s9 = scalar_select 0, %s8, %s6
  loop: start=0, step=1, limit=4
  $region2: #{deterministic_world_forward.1} parent=0 // loop_pre_header
    _
  $region3: #{deterministic_world_forward.1} parent=0 // loop_header
    %s11 = sphi 0, %s15
    %p12 = scmp.ge.s32.totalorder %s11, 4
    %s21 = sphi 0, %s23
    %s24 = sphi 0, %s21
    %s25 = sphi 0, %s24
    %s41 = sphi 0, %s25
    %s45 = sphi 0, %s45
    %s47 = sphi 0, %s45
    %s48 = sphi 0, %s47
    %s62 = sphi 0, %s48
    %s66 = sphi 0, %s66
    %s68 = sphi 0, %s66
    %s69 = sphi 0, %s68
    %s83 = sphi 0, %s69
    %s87 = sphi 0, %s87
    %s89 = sphi 0, %s87
    %s90 = sphi 0, %s89
    %s104 = sphi 0, %s90
    %s108 = sphi 0, %s108
    %s110 = sphi 0, %s108
    %s111 = sphi 0, %s110
    %s125 = sphi 0, %s111
    %s131 = sphi 0, %s133
    %s134 = sphi 0, %s131
    %s135 = sphi 0, %s134
    %s151 = sphi 0, %s135
  $region4: #{deterministic_world_forward.1} parent=0 // loop_header_branch
    %14 = sbr.rel (%p12) target = $region8
  $region5: #{deterministic_world_forward.1} parent=0 // loop_body
    %s16 = ssub.s32 %s11, 1
    %s17 = ssub.s32 %s11, 2
    %s18 = sadd.s32 %s11, 1
    %s19 = ssub.s32 %s11, %s18
    %p20 = scmp.eq.s32.totalorder %s19, 0
    %s22 = sadd.s32 %s21, 1
    %s23 = scalar_select %p20, %s21, %s22
    %p26 = pneg %p20
    %p27 = scmp.eq.s32.totalorder %s11, 1
    %p28 = por %p26, %p27
    %p29 = scmp.ne.s32.totalorder %s21, %s24
    %p30 = scmp.eq.s32.totalorder %s11, 0
    %p31 = por %p29, %p30
    %p32 = scmp.ne.s32.totalorder %s21, %s24
    %p33 = scmp.eq.s32.totalorder %s16, 1
    %p34 = por %p32, %p33
    %p35 = scmp.ne.s32.totalorder %s24, %s25
    %p36 = scmp.eq.s32.totalorder %s16, 0
    %p37 = por %p35, %p36
    %p38 = scmp.ne.s32.totalorder %s24, %s25
    %p39 = scmp.eq.s32.totalorder %s17, 1
    %p40 = por %p38, %p39
    %p42 = scmp.ne.s32.totalorder %s25, %s41
    %p43 = scmp.eq.s32.totalorder %s17, 0
    %p44 = por %p42, %p43
    %s46 = sadd.s32 %s45, 1
    %p49 = scmp.eq.s32.totalorder %s11, 1
    %p50 = scmp.ne.s32.totalorder %s45, %s47
    %p51 = scmp.eq.s32.totalorder %s11, 0
    %p52 = por %p50, %p51
    %p53 = scmp.ne.s32.totalorder %s45, %s47
    %p54 = scmp.eq.s32.totalorder %s16, 1
    %p55 = por %p53, %p54
    %p56 = scmp.ne.s32.totalorder %s47, %s48
    %p57 = scmp.eq.s32.totalorder %s16, 0
    %p58 = por %p56, %p57
    %p59 = scmp.ne.s32.totalorder %s47, %s48
    %p60 = scmp.eq.s32.totalorder %s17, 1
    %p61 = por %p59, %p60
    %p63 = scmp.ne.s32.totalorder %s48, %s62
    %p64 = scmp.eq.s32.totalorder %s17, 0
    %p65 = por %p63, %p64
    %s67 = sadd.s32 %s66, 1
    %p70 = scmp.eq.s32.totalorder %s11, 1
    %p71 = scmp.ne.s32.totalorder %s66, %s68
    %p72 = scmp.eq.s32.totalorder %s11, 0
    %p73 = por %p71, %p72
    %p74 = scmp.ne.s32.totalorder %s66, %s68
    %p75 = scmp.eq.s32.totalorder %s16, 1
    %p76 = por %p74, %p75
    %p77 = scmp.ne.s32.totalorder %s68, %s69
    %p78 = scmp.eq.s32.totalorder %s16, 0
    %p79 = por %p77, %p78
    %p80 = scmp.ne.s32.totalorder %s68, %s69
    %p81 = scmp.eq.s32.totalorder %s17, 1
    %p82 = por %p80, %p81
    %p84 = scmp.ne.s32.totalorder %s69, %s83
    %p85 = scmp.eq.s32.totalorder %s17, 0
    %p86 = por %p84, %p85
    %s88 = sadd.s32 %s87, 1
    %p91 = scmp.eq.s32.totalorder %s11, 1
    %p92 = scmp.ne.s32.totalorder %s87, %s89
    %p93 = scmp.eq.s32.totalorder %s11, 0
    %p94 = por %p92, %p93
    %p95 = scmp.ne.s32.totalorder %s87, %s89
    %p96 = scmp.eq.s32.totalorder %s16, 1
    %p97 = por %p95, %p96
    %p98 = scmp.ne.s32.totalorder %s89, %s90
    %p99 = scmp.eq.s32.totalorder %s16, 0
    %p100 = por %p98, %p99
    %p101 = scmp.ne.s32.totalorder %s89, %s90
    %p102 = scmp.eq.s32.totalorder %s17, 1
    %p103 = por %p101, %p102
    %p105 = scmp.ne.s32.totalorder %s90, %s104
    %p106 = scmp.eq.s32.totalorder %s17, 0
    %p107 = por %p105, %p106
    %s109 = sadd.s32 %s108, 1
    %p112 = scmp.eq.s32.totalorder %s11, 1
    %p113 = scmp.ne.s32.totalorder %s108, %s110
    %p114 = scmp.eq.s32.totalorder %s11, 0
    %p115 = por %p113, %p114
    %p116 = scmp.ne.s32.totalorder %s108, %s110
    %p117 = scmp.eq.s32.totalorder %s16, 1
    %p118 = por %p116, %p117
    %p119 = scmp.ne.s32.totalorder %s110, %s111
    %p120 = scmp.eq.s32.totalorder %s16, 0
    %p121 = por %p119, %p120
    %p122 = scmp.ne.s32.totalorder %s110, %s111
    %p123 = scmp.eq.s32.totalorder %s17, 1
    %p124 = por %p122, %p123
    %p126 = scmp.ne.s32.totalorder %s111, %s125
    %p127 = scmp.eq.s32.totalorder %s17, 0
    %p128 = por %p126, %p127
    %s129 = ssub.s32 %s11, %s18
    %p130 = scmp.eq.s32.totalorder %s129, 0
    %s132 = sadd.s32 %s131, 1
    %s133 = scalar_select %p130, %s131, %s132
    %p136 = pneg %p130
    %p137 = scmp.eq.s32.totalorder %s11, 1
    %p138 = por %p136, %p137
    %p139 = scmp.ne.s32.totalorder %s131, %s134
    %p140 = scmp.eq.s32.totalorder %s11, 0
    %p141 = por %p139, %p140
    %p142 = scmp.ne.s32.totalorder %s131, %s134
    %p143 = scmp.eq.s32.totalorder %s16, 1
    %p144 = por %p142, %p143
    %p145 = scmp.ne.s32.totalorder %s134, %s135
    %p146 = scmp.eq.s32.totalorder %s16, 0
    %p147 = por %p145, %p146
    %p148 = scmp.ne.s32.totalorder %s134, %s135
    %p149 = scmp.eq.s32.totalorder %s17, 1
    %p150 = por %p148, %p149
    %p152 = scmp.ne.s32.totalorder %s135, %s151
    %p153 = scmp.eq.s32.totalorder %s17, 0
    %p154 = por %p152, %p153
    %p155 = scmp.le.s32.totalorder 1, %s11
    %p156 = scmp.lt.s32.totalorder %s11, 3
    %p157 = pnand %p155, %p156
    %p158 = pneg %p157
    // Predicated region
    $region9: #{deterministic_world_forward.1} parent=5 // pred_check
      _
    $region10: #{deterministic_world_forward.1} parent=5 // pred_check_branch
      %160 = sbr.rel (%p157) target = $region12
    $region11: #{deterministic_world_forward.1} parent=5 // pred_region
      %s161 = ssub.s32 %s11, 1
      // Predicated region
      $region13: #{deterministic_world_forward.1} parent=11 // pred_check
        %p162 = pneg %p58
      $region14: #{deterministic_world_forward.1} parent=11 // pred_check_branch
        %164 = sbr.rel (%p162) target = $region16
      $region15: #{deterministic_world_forward.1} parent=11 // pred_region
        _
      $region16: #{deterministic_world_forward.1} parent=11 // pred_fallthru
        _
      // Predicated region
      $region17: #{deterministic_world_forward.1} parent=11 // pred_check
        %p165 = pneg %p79
      $region18: #{deterministic_world_forward.1} parent=11 // pred_check_branch
        %167 = sbr.rel (%p165) target = $region20
      $region19: #{deterministic_world_forward.1} parent=11 // pred_region
        _
      $region20: #{deterministic_world_forward.1} parent=11 // pred_fallthru
        _
      // Predicated region
      $region21: #{deterministic_world_forward.1} parent=11 // pred_check
        %p168 = pneg %p100
      $region22: #{deterministic_world_forward.1} parent=11 // pred_check_branch
        %170 = sbr.rel (%p168) target = $region24
      $region23: #{deterministic_world_forward.1} parent=11 // pred_region
        _
      $region24: #{deterministic_world_forward.1} parent=11 // pred_fallthru
        _
      // Predicated region
      $region25: #{deterministic_world_forward.1} parent=11 // pred_check
        %p171 = pneg %p121
      $region26: #{deterministic_world_forward.1} parent=11 // pred_check_branch
        %173 = sbr.rel (%p171) target = $region28
      $region27: #{deterministic_world_forward.1} parent=11 // pred_region
        _
      $region28: #{deterministic_world_forward.1} parent=11 // pred_fallthru
        _
    $region12: #{deterministic_world_forward.1} parent=5 // pred_fallthru
      _
    %p174 = scmp.lt.s32.totalorder %s11, 2
    // Predicated region
    $region29: #{deterministic_world_forward.1} parent=5 // pred_check
      %p175 = pneg %p174
    $region30: #{deterministic_world_forward.1} parent=5 // pred_check_branch
      %177 = sbr.rel (%p175) target = $region32
    $region31: #{deterministic_world_forward.1} parent=5 // pred_region
      // Predicated region
      $region33: #{deterministic_world_forward.1} parent=31 // pred_check
        %p178 = pneg %p31
      $region34: #{deterministic_world_forward.1} parent=31 // pred_check_branch
        %180 = sbr.rel (%p178) target = $region36
      $region35: #{deterministic_world_forward.1} parent=31 // pred_region
        %s181 = smul.u32 16, %s11
        %p182 = scmp.lt.s32.totalorder %s181, 31
        %s183 = scalar_select %p182, %s181, 31
        %s184 = smul.addr %s183, 8
        %s185 = scalar_lea.vmem %s0, %s184
        %s186 = smul.u32 16, %s11
      $region36: #{deterministic_world_forward.1} parent=31 // pred_fallthru
        _
    $region32: #{deterministic_world_forward.1} parent=5 // pred_fallthru
      _
    %p187 = scmp.le.s32.totalorder 1, %s11
    %p188 = scmp.lt.s32.totalorder %s11, 3
    %p189 = pnand %p187, %p188
    %p190 = pneg %p189
    // Predicated region
    $region37: #{deterministic_world_forward.1} parent=5 // pred_check
      _
    $region38: #{deterministic_world_forward.1} parent=5 // pred_check_branch
      %192 = sbr.rel (%p189) target = $region40
    $region39: #{deterministic_world_forward.1} parent=5 // pred_region
      %s193 = ssub.s32 %s11, 1
      %s194 = smul.u32 16, %s16
      %p195 = scmp.lt.s32.totalorder %s194, 31
      %s196 = scalar_select %p195, %s194, 31
      %s197 = smul.addr %s196, 8
      %s198 = scalar_lea.vmem %s0, %s197
      %p199 = pneg %p37
      %p200 = pneg %p34
      %p201 = pneg %p58
      %p202 = pneg %p55
      %p203 = pneg %p79
      %p204 = pneg %p76
      %p205 = pneg %p100
      %p206 = pneg %p97
      %p207 = pneg %p121
      %p208 = pneg %p118
      %p209 = pneg %p147
      %p210 = pneg %p144
      %s211 = smul.u32 16, %s16
      %p212 = scmp.lt.s32.totalorder %s211, 31
      %s213 = scalar_select %p212, %s211, 31
      %s214 = smul.addr %s213, 8
      %s215 = scalar_lea.vmem %s5, %s214
      %s216 = smul.u32 16, %s16
      %p217 = scmp.lt.s32.totalorder %s216, 31
      %s218 = scalar_select %p217, %s216, 31
      %s219 = smul.addr %s218, 8
      %s220 = scalar_lea.vmem %s0, %s219
      %s221 = smul.u32 16, %s16
      %s222 = smul.u32 16, %s16
      %p223 = scmp.lt.s32.totalorder %s222, 31
      %s224 = scalar_select %p223, %s222, 31
      %s225 = smul.addr %s224, 8
      %s226 = scalar_lea.vmem %s5, %s225
      %s227 = smul.u32 16, %s16
      %v229 = vld [vmem:[%s4] sm:$0x1]
      %v230 = vld [vmem:[%s4 + $0x1] sm:$0x1]
      %v231 = vld [vmem:[%s4 + $0x2] sm:$0x1]
      %v232 = vld [vmem:[%s220] sm:$0xff]
      %v233 = vld [vmem:[%s220 + $0x8] sm:$0xff]
      %v234 = vld [vmem:[%s220 + $0x10] sm:$0xff]
      %v235 = vld [vmem:[%s220 + $0x18] sm:$0xff]
      %v236 = vld [vmem:[%s220 + $0x20] sm:$0xff]
      %v237 = vld [vmem:[%s220 + $0x28] sm:$0xff]
      %v238 = vld [vmem:[%s220 + $0x30] sm:$0xff]
      %v239 = vld [vmem:[%s220 + $0x38] sm:$0xff]
      %v240 = vld [vmem:[%s220 + $0x40] sm:$0xff]
      %v241 = vld [vmem:[%s220 + $0x48] sm:$0xff]
      %v242 = vld [vmem:[%s220 + $0x50] sm:$0xff]
      %v243 = vld [vmem:[%s220 + $0x58] sm:$0xff]
      %v244 = vld [vmem:[%s220 + $0x60] sm:$0xff]
      %v245 = vld [vmem:[%s220 + $0x68] sm:$0xff]
      %v246 = vld [vmem:[%s220 + $0x70] sm:$0xff]
      %v247 = vld [vmem:[%s220 + $0x78] sm:$0xff]
      %v248 = vpack.c.bf16 %v233, %v232
      %v249 = vpack.c.bf16 %v235, %v234
      %v250 = vpack.c.bf16 %v237, %v236
      %v251 = vpack.c.bf16 %v239, %v238
      %v252 = vpack.c.bf16 %v241, %v240
      %v253 = vpack.c.bf16 %v243, %v242
      %v254 = vpack.c.bf16 %v245, %v244
      %v255 = vpack.c.bf16 %v247, %v246
      %v256 = vld [vmem:[%s1] sm:$0xf]
      %v257 = vld [vmem:[%s1 + $0x4] sm:$0xf]
      %v258 = vld [vmem:[%s1 + $0x8] sm:$0xf]
      %v259 = vld [vmem:[%s1 + $0xc] sm:$0xf]
      %v261 = vlaneseq
      %v262 = vshrl.u32 %v261, 7
      %v263 = vsub.s32 0, %v262
      %v264 = vrot.slane %v229, %v263
      %v270 = vunpack.c.l.b16 %v256
      %v271 = vunpack.c.l.b16 %v257
      %v272 = vunpack.c.l.b16 %v258
      %v273 = vunpack.c.l.b16 %v259
      %v274 = vpack.c.b16 %v271, %v270
      %v275 = vpack.c.b16 %v273, %v272
      %vm278 = vcmask 261120
      %v280 = vsel %vm278, %v248, 0
      %v283 = vsel %vm278, %v249, 0
      %v286 = vsel %vm278, %v250, 0
      %v289 = vsel %vm278, %v251, 0
      %v292 = vsel %vm278, %v252, 0
      %v295 = vsel %vm278, %v253, 0
      %v298 = vsel %vm278, %v254, 0
      %v301 = vsel %vm278, %v255, 0
      %303 = vmatprep.subr.bf16.mxu0 0
      %304 = vmatpush1.bf16.msra.mxu0 %v274
      %305 = vmatprep.subr.bf16.mxu0 0
      %306 = vmatpush1.bf16.msra.mxu0 %v275
      %307 = vmatprep.subr.bf16.mxu0 0
      %308 = vmatpush1.bf16.msra.mxu0 0
      %309 = vmatprep.subr.bf16.mxu0 0
      %310 = vmatpush1.bf16.msra.mxu0 0
      %311 = vmatprep.subr.bf16.mxu0 0
      %312 = vmatpush1.bf16.msra.mxu0 0
      %313 = vmatprep.subr.bf16.mxu0 0
      %314 = vmatpush1.bf16.msra.mxu0 0
      %315 = vmatprep.subr.bf16.mxu0 0
      %316 = vmatpush1.bf16.msra.mxu0 0
      %317 = vmatprep.subr.bf16.mxu0 0
      %318 = vmatpush1.bf16.msra.mxu0 0
      %319 = vmatprep.subr.bf16.mxu0 0
      %320 = vmatpush1.bf16.msra.mxu0 0
      %321 = vmatprep.subr.bf16.mxu0 0
      %322 = vmatpush1.bf16.msra.mxu0 0
      %323 = vmatprep.subr.bf16.mxu0 0
      %324 = vmatpush1.bf16.msra.mxu0 0
      %325 = vmatprep.subr.bf16.mxu0 0
      %326 = vmatpush1.bf16.msra.mxu0 0
      %327 = vmatprep.subr.bf16.mxu0 0
      %328 = vmatpush1.bf16.msra.mxu0 0
      %329 = vmatprep.subr.bf16.mxu0 0
      %330 = vmatpush1.bf16.msra.mxu0 0
      %331 = vmatprep.subr.bf16.mxu0 0
      %332 = vmatpush1.bf16.msra.mxu0 0
      %333 = vmatprep.subr.bf16.mxu0 0
      %334 = vmatpush1.bf16.msra.mxu0 0
      %335 = vmatprep.mubr.bf16.mxu0 0
      %336 = vmatmul.mubr.bf16.gmra.mrb[0].mxu0 %v280
      %v337 = vpop.f32.mrb[0].mxu0
      %v338 = vadd.f32 %v264, %v337
      %v339 = vpop.f32.mrb[0].mxu0
      %v340 = vpop.f32.mrb[0].mxu0
      %v341 = vadd.f32 %v264, %v340
      %v342 = vpop.f32.mrb[0].mxu0
      %343 = vmatprep.mubr.bf16.mxu0 0
      %344 = vmatmul.mubr.bf16.gmra.mrb[0].mxu0 %v283
      %v345 = vpop.f32.mrb[0].mxu0
      %v346 = vadd.f32 %v264, %v345
      %v347 = vpop.f32.mrb[0].mxu0
      %v348 = vpop.f32.mrb[0].mxu0
      %v349 = vadd.f32 %v264, %v348
      %v350 = vpop.f32.mrb[0].mxu0
      %351 = vmatprep.mubr.bf16.mxu0 0
      %352 = vmatmul.mubr.bf16.gmra.mrb[0].mxu0 %v286
      %v353 = vpop.f32.mrb[0].mxu0
      %v354 = vadd.f32 %v264, %v353
      %v355 = vpop.f32.mrb[0].mxu0
      %v356 = vpop.f32.mrb[0].mxu0
      %v357 = vadd.f32 %v264, %v356
      %v358 = vpop.f32.mrb[0].mxu0
      %359 = vmatprep.mubr.bf16.mxu0 0
      %360 = vmatmul.mubr.bf16.gmra.mrb[0].mxu0 %v289
      %v361 = vpop.f32.mrb[0].mxu0
      %v362 = vadd.f32 %v264, %v361
      %v363 = vpop.f32.mrb[0].mxu0
      %v364 = vpop.f32.mrb[0].mxu0
      %v365 = vadd.f32 %v264, %v364
      %v366 = vpop.f32.mrb[0].mxu0
      %367 = vmatprep.mubr.bf16.mxu0 0
      %368 = vmatmul.mubr.bf16.gmra.mrb[0].mxu0 %v292
      %v369 = vpop.f32.mrb[0].mxu0
      %v370 = vadd.f32 %v264, %v369
      %v371 = vpop.f32.mrb[0].mxu0
      %v372 = vpop.f32.mrb[0].mxu0
      %v373 = vadd.f32 %v264, %v372
      %v374 = vpop.f32.mrb[0].mxu0
      %375 = vmatprep.mubr.bf16.mxu0 0
      %376 = vmatmul.mubr.bf16.gmra.mrb[0].mxu0 %v295
      %v377 = vpop.f32.mrb[0].mxu0
      %v378 = vadd.f32 %v264, %v377
      %v379 = vpop.f32.mrb[0].mxu0
      %v380 = vpop.f32.mrb[0].mxu0
      %v381 = vadd.f32 %v264, %v380
      %v382 = vpop.f32.mrb[0].mxu0
      %383 = vmatprep.mubr.bf16.mxu0 0
      %384 = vmatmul.mubr.bf16.gmra.mrb[0].mxu0 %v298
      %v385 = vpop.f32.mrb[0].mxu0
      %v386 = vadd.f32 %v264, %v385
      %v387 = vpop.f32.mrb[0].mxu0
      %v388 = vpop.f32.mrb[0].mxu0
      %v389 = vadd.f32 %v264, %v388
      %v390 = vpop.f32.mrb[0].mxu0
      %391 = vmatprep.mubr.bf16.mxu0 0
      %392 = vmatmul.mubr.bf16.gmra.mrb[0].mxu0 %v301
      %v393 = vpop.f32.mrb[0].mxu0
      %v394 = vadd.f32 %v264, %v393
      %v395 = vpop.f32.mrb[0].mxu0
      %v396 = vpop.f32.mrb[0].mxu0
      %v397 = vadd.f32 %v264, %v396
      %v398 = vpop.f32.mrb[0].mxu0
      %399 = vdwg.mxu0
      %v400 = vmax.f32 %v338, 0.0
      %v401 = vmax.f32 %v341, 0.0
      %v402 = vmax.f32 %v346, 0.0
      %v403 = vmax.f32 %v349, 0.0
      %v404 = vmax.f32 %v354, 0.0
      %v405 = vmax.f32 %v357, 0.0
      %v406 = vmax.f32 %v362, 0.0
      %v407 = vmax.f32 %v365, 0.0
      %v408 = vmax.f32 %v370, 0.0
      %v409 = vmax.f32 %v373, 0.0
      %v410 = vmax.f32 %v378, 0.0
      %v411 = vmax.f32 %v381, 0.0
      %v412 = vmax.f32 %v386, 0.0
      %v413 = vmax.f32 %v389, 0.0
      %v414 = vmax.f32 %v394, 0.0
      %v415 = vmax.f32 %v397, 0.0
      %v416 = vpack.c.bf16 %v401, %v400
      %v417 = vpack.c.bf16 %v403, %v402
      %v418 = vpack.c.bf16 %v405, %v404
      %v419 = vpack.c.bf16 %v407, %v406
      %v420 = vpack.c.bf16 %v409, %v408
      %v421 = vpack.c.bf16 %v411, %v410
      %v422 = vpack.c.bf16 %v413, %v412
      %v423 = vpack.c.bf16 %v415, %v414
      %v424 = vld [vmem:[%s2] sm:$0xf]
      %v425 = vld [vmem:[%s2 + $0x4] sm:$0xf]
      %v426 = vld [vmem:[%s2 + $0x8] sm:$0xf]
      %v427 = vld [vmem:[%s2 + $0xc] sm:$0xf]
      %v428 = vld [vmem:[%s2 + $0x10] sm:$0xf]
      %v429 = vld [vmem:[%s2 + $0x14] sm:$0xf]
      %v430 = vld [vmem:[%s2 + $0x18] sm:$0xf]
      %v431 = vld [vmem:[%s2 + $0x1c] sm:$0xf]
      %v432 = vld [vmem:[%s2 + $0x20] sm:$0xf]
      %v433 = vld [vmem:[%s2 + $0x24] sm:$0xf]
      %v434 = vld [vmem:[%s2 + $0x28] sm:$0xf]
      %v435 = vld [vmem:[%s2 + $0x2c] sm:$0xf]
      %v436 = vld [vmem:[%s2 + $0x30] sm:$0xf]
      %v437 = vld [vmem:[%s2 + $0x34] sm:$0xf]
      %v438 = vld [vmem:[%s2 + $0x38] sm:$0xf]
      %v439 = vld [vmem:[%s2 + $0x3c] sm:$0xf]
      %v441 = vlaneseq
      %v442 = vshrl.u32 %v441, 7
      %v443 = vsub.s32 0, %v442
      %v444 = vrot.slane %v230, %v443
      %v462 = vunpack.c.l.b16 %v424
      %v463 = vunpack.c.l.b16 %v425
      %v464 = vunpack.c.l.b16 %v426
      %v465 = vunpack.c.l.b16 %v427
      %v466 = vunpack.c.l.b16 %v428
      %v467 = vunpack.c.l.b16 %v429
      %v468 = vunpack.c.l.b16 %v430
      %v469 = vunpack.c.l.b16 %v431
      %v470 = vunpack.c.l.b16 %v432
      %v471 = vunpack.c.l.b16 %v433
      %v472 = vunpack.c.l.b16 %v434
      %v473 = vunpack.c.l.b16 %v435
      %v474 = vunpack.c.l.b16 %v436
      %v475 = vunpack.c.l.b16 %v437
      %v476 = vunpack.c.l.b16 %v438
      %v477 = vunpack.c.l.b16 %v439
      %v478 = vpack.c.b16 %v463, %v462
      %v479 = vpack.c.b16 %v465, %v464
      %v480 = vpack.c.b16 %v467, %v466
      %v481 = vpack.c.b16 %v469, %v468
      %v482 = vpack.c.b16 %v471, %v470
      %v483 = vpack.c.b16 %v473, %v472
      %v484 = vpack.c.b16 %v475, %v474
      %v485 = vpack.c.b16 %v477, %v476
      %494 = vmatprep.subr.bf16.mxu0 0
      %495 = vmatpush1.bf16.msra.mxu0 %v478
      %496 = vmatprep.subr.bf16.mxu0 0
      %497 = vmatpush1.bf16.msra.mxu0 %v479
      %498 = vmatprep.subr.bf16.mxu0 0
      %499 = vmatpush1.bf16.msra.mxu0 %v480
      %500 = vmatprep.subr.bf16.mxu0 0
      %501 = vmatpush1.bf16.msra.mxu0 %v481
      %502 = vmatprep.subr.bf16.mxu0 0
      %503 = vmatpush1.bf16.msra.mxu0 %v482
      %504 = vmatprep.subr.bf16.mxu0 0
      %505 = vmatpush1.bf16.msra.mxu0 %v483
      %506 = vmatprep.subr.bf16.mxu0 0
      %507 = vmatpush1.bf16.msra.mxu0 %v484
      %508 = vmatprep.subr.bf16.mxu0 0
      %509 = vmatpush1.bf16.msra.mxu0 %v485
      %510 = vmatprep.subr.bf16.mxu0 0
      %511 = vmatpush1.bf16.msra.mxu0 0
      %512 = vmatprep.subr.bf16.mxu0 0
      %513 = vmatpush1.bf16.msra.mxu0 0
      %514 = vmatprep.subr.bf16.mxu0 0
      %515 = vmatpush1.bf16.msra.mxu0 0
      %516 = vmatprep.subr.bf16.mxu0 0
      %517 = vmatpush1.bf16.msra.mxu0 0
      %518 = vmatprep.subr.bf16.mxu0 0
      %519 = vmatpush1.bf16.msra.mxu0 0
      %520 = vmatprep.subr.bf16.mxu0 0
      %521 = vmatpush1.bf16.msra.mxu0 0
      %522 = vmatprep.subr.bf16.mxu0 0
      %523 = vmatpush1.bf16.msra.mxu0 0
      %524 = vmatprep.subr.bf16.mxu0 0
      %525 = vmatpush1.bf16.msra.mxu0 0
      %526 = vmatprep.mubr.bf16.mxu0 0
      %527 = vmatmul.mubr.bf16.gmra.mrb[0].mxu0 %v416
      %v528 = vpop.f32.mrb[0].mxu0
      %v529 = vadd.f32 %v444, %v528
      %v530 = vpop.f32.mrb[0].mxu0
      %v531 = vpop.f32.mrb[0].mxu0
      %v532 = vadd.f32 %v444, %v531
      %v533 = vpop.f32.mrb[0].mxu0
      %534 = vmatprep.mubr.bf16.mxu0 0
      %535 = vmatmul.mubr.bf16.gmra.mrb[0].mxu0 %v417
      %v536 = vpop.f32.mrb[0].mxu0
      %v537 = vadd.f32 %v444, %v536
      %v538 = vpop.f32.mrb[0].mxu0
      %v539 = vpop.f32.mrb[0].mxu0
      %v540 = vadd.f32 %v444, %v539
      %v541 = vpop.f32.mrb[0].mxu0
      %542 = vmatprep.mubr.bf16.mxu0 0
      %543 = vmatmul.mubr.bf16.gmra.mrb[0].mxu0 %v418
      %v544 = vpop.f32.mrb[0].mxu0
      %v545 = vadd.f32 %v444, %v544
      %v546 = vpop.f32.mrb[0].mxu0
      %v547 = vpop.f32.mrb[0].mxu0
      %v548 = vadd.f32 %v444, %v547
      %v549 = vpop.f32.mrb[0].mxu0
      %550 = vmatprep.mubr.bf16.mxu0 0
      %551 = vmatmul.mubr.bf16.gmra.mrb[0].mxu0 %v419
      %v552 = vpop.f32.mrb[0].mxu0
      %v553 = vadd.f32 %v444, %v552
      %v554 = vpop.f32.mrb[0].mxu0
      %v555 = vpop.f32.mrb[0].mxu0
      %v556 = vadd.f32 %v444, %v555
      %v557 = vpop.f32.mrb[0].mxu0
      %558 = vmatprep.mubr.bf16.mxu0 0
      %559 = vmatmul.mubr.bf16.gmra.mrb[0].mxu0 %v420
      %v560 = vpop.f32.mrb[0].mxu0
      %v561 = vadd.f32 %v444, %v560
      %v562 = vpop.f32.mrb[0].mxu0
      %v563 = vpop.f32.mrb[0].mxu0
      %v564 = vadd.f32 %v444, %v563
      %v565 = vpop.f32.mrb[0].mxu0
      %566 = vmatprep.mubr.bf16.mxu0 0
      %567 = vmatmul.mubr.bf16.gmra.mrb[0].mxu0 %v421
      %v568 = vpop.f32.mrb[0].mxu0
      %v569 = vadd.f32 %v444, %v568
      %v570 = vpop.f32.mrb[0].mxu0
      %v571 = vpop.f32.mrb[0].mxu0
      %v572 = vadd.f32 %v444, %v571
      %v573 = vpop.f32.mrb[0].mxu0
      %574 = vmatprep.mubr.bf16.mxu0 0
      %575 = vmatmul.mubr.bf16.gmra.mrb[0].mxu0 %v422
      %v576 = vpop.f32.mrb[0].mxu0
      %v577 = vadd.f32 %v444, %v576
      %v578 = vpop.f32.mrb[0].mxu0
      %v579 = vpop.f32.mrb[0].mxu0
      %v580 = vadd.f32 %v444, %v579
      %v581 = vpop.f32.mrb[0].mxu0
      %582 = vmatprep.mubr.bf16.mxu0 0
      %583 = vmatmul.mubr.bf16.gmra.mrb[0].mxu0 %v423
      %v584 = vpop.f32.mrb[0].mxu0
      %v585 = vadd.f32 %v444, %v584
      %v586 = vpop.f32.mrb[0].mxu0
      %v587 = vpop.f32.mrb[0].mxu0
      %v588 = vadd.f32 %v444, %v587
      %v589 = vpop.f32.mrb[0].mxu0
      %590 = vdwg.mxu0
      %v591 = vmax.f32 %v529, 0.0
      %v592 = vmax.f32 %v532, 0.0
      %v593 = vmax.f32 %v537, 0.0
      %v594 = vmax.f32 %v540, 0.0
      %v595 = vmax.f32 %v545, 0.0
      %v596 = vmax.f32 %v548, 0.0
      %v597 = vmax.f32 %v553, 0.0
      %v598 = vmax.f32 %v556, 0.0
      %v599 = vmax.f32 %v561, 0.0
      %v600 = vmax.f32 %v564, 0.0
      %v601 = vmax.f32 %v569, 0.0
      %v602 = vmax.f32 %v572, 0.0
      %v603 = vmax.f32 %v577, 0.0
      %v604 = vmax.f32 %v580, 0.0
      %v605 = vmax.f32 %v585, 0.0
      %v606 = vmax.f32 %v588, 0.0
      %v607 = vpack.c.bf16 %v592, %v591
      %v608 = vpack.c.bf16 %v594, %v593
      %v609 = vpack.c.bf16 %v596, %v595
      %v610 = vpack.c.bf16 %v598, %v597
      %v611 = vpack.c.bf16 %v600, %v599
      %v612 = vpack.c.bf16 %v602, %v601
      %v613 = vpack.c.bf16 %v604, %v603
      %v614 = vpack.c.bf16 %v606, %v605
      %v615 = vld [vmem:[%s3] sm:$0xf]
      %v616 = vld [vmem:[%s3 + $0x4] sm:$0xf]
      %v617 = vld [vmem:[%s3 + $0x8] sm:$0xf]
      %v618 = vld [vmem:[%s3 + $0xc] sm:$0xf]
      %v619 = vld [vmem:[%s3 + $0x10] sm:$0xf]
      %v620 = vld [vmem:[%s3 + $0x14] sm:$0xf]
      %v621 = vld [vmem:[%s3 + $0x18] sm:$0xf]
      %v622 = vld [vmem:[%s3 + $0x1c] sm:$0xf]
      %v623 = vld [vmem:[%s3 + $0x20] sm:$0xf]
      %v624 = vld [vmem:[%s3 + $0x24] sm:$0xf]
      %v625 = vld [vmem:[%s3 + $0x28] sm:$0xf]
      %v626 = vld [vmem:[%s3 + $0x2c] sm:$0xf]
      %v627 = vld [vmem:[%s3 + $0x30] sm:$0xf]
      %v628 = vld [vmem:[%s3 + $0x34] sm:$0xf]
      %v629 = vld [vmem:[%s3 + $0x38] sm:$0xf]
      %v630 = vld [vmem:[%s3 + $0x3c] sm:$0xf]
      %v632 = vlaneseq
      %v633 = vshrl.u32 %v632, 7
      %v634 = vsub.s32 0, %v633
      %v635 = vrot.slane %v231, %v634
      %v653 = vunpack.c.l.b16 %v615
      %v654 = vunpack.c.l.b16 %v616
      %v655 = vunpack.c.l.b16 %v617
      %v656 = vunpack.c.l.b16 %v618
      %v657 = vunpack.c.l.b16 %v619
      %v658 = vunpack.c.l.b16 %v620
      %v659 = vunpack.c.l.b16 %v621
      %v660 = vunpack.c.l.b16 %v622
      %v661 = vunpack.c.l.b16 %v623
      %v662 = vunpack.c.l.b16 %v624
      %v663 = vunpack.c.l.b16 %v625
      %v664 = vunpack.c.l.b16 %v626
      %v665 = vunpack.c.l.b16 %v627
      %v666 = vunpack.c.l.b16 %v628
      %v667 = vunpack.c.l.b16 %v629
      %v668 = vunpack.c.l.b16 %v630
      %v669 = vpack.c.b16 %v654, %v653
      %v670 = vpack.c.b16 %v656, %v655
      %v671 = vpack.c.b16 %v658, %v657
      %v672 = vpack.c.b16 %v660, %v659
      %v673 = vpack.c.b16 %v662, %v661
      %v674 = vpack.c.b16 %v664, %v663
      %v675 = vpack.c.b16 %v666, %v665
      %v676 = vpack.c.b16 %v668, %v667
      %685 = vmatprep.subr.bf16.mxu0 0
      %686 = vmatpush1.bf16.msra.mxu0 %v669
      %687 = vmatprep.subr.bf16.mxu0 0
      %688 = vmatpush1.bf16.msra.mxu0 %v670
      %689 = vmatprep.subr.bf16.mxu0 0
      %690 = vmatpush1.bf16.msra.mxu0 %v671
      %691 = vmatprep.subr.bf16.mxu0 0
      %692 = vmatpush1.bf16.msra.mxu0 %v672
      %693 = vmatprep.subr.bf16.mxu0 0
      %694 = vmatpush1.bf16.msra.mxu0 %v673
      %695 = vmatprep.subr.bf16.mxu0 0
      %696 = vmatpush1.bf16.msra.mxu0 %v674
      %697 = vmatprep.subr.bf16.mxu0 0
      %698 = vmatpush1.bf16.msra.mxu0 %v675
      %699 = vmatprep.subr.bf16.mxu0 0
      %700 = vmatpush1.bf16.msra.mxu0 %v676
      %701 = vmatprep.subr.bf16.mxu0 0
      %702 = vmatpush1.bf16.msra.mxu0 0
      %703 = vmatprep.subr.bf16.mxu0 0
      %704 = vmatpush1.bf16.msra.mxu0 0
      %705 = vmatprep.subr.bf16.mxu0 0
      %706 = vmatpush1.bf16.msra.mxu0 0
      %707 = vmatprep.subr.bf16.mxu0 0
      %708 = vmatpush1.bf16.msra.mxu0 0
      %709 = vmatprep.subr.bf16.mxu0 0
      %710 = vmatpush1.bf16.msra.mxu0 0
      %711 = vmatprep.subr.bf16.mxu0 0
      %712 = vmatpush1.bf16.msra.mxu0 0
      %713 = vmatprep.subr.bf16.mxu0 0
      %714 = vmatpush1.bf16.msra.mxu0 0
      %715 = vmatprep.subr.bf16.mxu0 0
      %716 = vmatpush1.bf16.msra.mxu0 0
      %717 = vmatprep.mubr.bf16.mxu0 0
      %718 = vmatmul.mubr.bf16.gmra.mrb[0].mxu0 %v607
      %v719 = vpop.f32.mrb[0].mxu0
      %v720 = vadd.f32 %v635, %v719
      %v721 = vpop.f32.mrb[0].mxu0
      %v722 = vpop.f32.mrb[0].mxu0
      %v723 = vadd.f32 %v635, %v722
      %v724 = vpop.f32.mrb[0].mxu0
      %725 = vmatprep.mubr.bf16.mxu0 0
      %726 = vmatmul.mubr.bf16.gmra.mrb[0].mxu0 %v608
      %v727 = vpop.f32.mrb[0].mxu0
      %v728 = vadd.f32 %v635, %v727
      %v729 = vpop.f32.mrb[0].mxu0
      %v730 = vpop.f32.mrb[0].mxu0
      %v731 = vadd.f32 %v635, %v730
      %v732 = vpop.f32.mrb[0].mxu0
      %733 = vmatprep.mubr.bf16.mxu0 0
      %734 = vmatmul.mubr.bf16.gmra.mrb[0].mxu0 %v609
      %v735 = vpop.f32.mrb[0].mxu0
      %v736 = vadd.f32 %v635, %v735
      %v737 = vpop.f32.mrb[0].mxu0
      %v738 = vpop.f32.mrb[0].mxu0
      %v739 = vadd.f32 %v635, %v738
      %v740 = vpop.f32.mrb[0].mxu0
      %741 = vmatprep.mubr.bf16.mxu0 0
      %742 = vmatmul.mubr.bf16.gmra.mrb[0].mxu0 %v610
      %v743 = vpop.f32.mrb[0].mxu0
      %v744 = vadd.f32 %v635, %v743
      %v745 = vpop.f32.mrb[0].mxu0
      %v746 = vpop.f32.mrb[0].mxu0
      %v747 = vadd.f32 %v635, %v746
      %v748 = vpop.f32.mrb[0].mxu0
      %749 = vmatprep.mubr.bf16.mxu0 0
      %750 = vmatmul.mubr.bf16.gmra.mrb[0].mxu0 %v611
      %v751 = vpop.f32.mrb[0].mxu0
      %v752 = vadd.f32 %v635, %v751
      %v753 = vpop.f32.mrb[0].mxu0
      %v754 = vpop.f32.mrb[0].mxu0
      %v755 = vadd.f32 %v635, %v754
      %v756 = vpop.f32.mrb[0].mxu0
      %757 = vmatprep.mubr.bf16.mxu0 0
      %758 = vmatmul.mubr.bf16.gmra.mrb[0].mxu0 %v612
      %v759 = vpop.f32.mrb[0].mxu0
      %v760 = vadd.f32 %v635, %v759
      %v761 = vpop.f32.mrb[0].mxu0
      %v762 = vpop.f32.mrb[0].mxu0
      %v763 = vadd.f32 %v635, %v762
      %v764 = vpop.f32.mrb[0].mxu0
      %765 = vmatprep.mubr.bf16.mxu0 0
      %766 = vmatmul.mubr.bf16.gmra.mrb[0].mxu0 %v613
      %v767 = vpop.f32.mrb[0].mxu0
      %v768 = vadd.f32 %v635, %v767
      %v769 = vpop.f32.mrb[0].mxu0
      %v770 = vpop.f32.mrb[0].mxu0
      %v771 = vadd.f32 %v635, %v770
      %v772 = vpop.f32.mrb[0].mxu0
      %773 = vmatprep.mubr.bf16.mxu0 0
      %774 = vmatmul.mubr.bf16.gmra.mrb[0].mxu0 %v614
      %v775 = vpop.f32.mrb[0].mxu0
      %v776 = vadd.f32 %v635, %v775
      %v777 = vpop.f32.mrb[0].mxu0
      %v778 = vpop.f32.mrb[0].mxu0
      %v779 = vadd.f32 %v635, %v778
      %v780 = vpop.f32.mrb[0].mxu0
      %781 = vdwg.mxu0
      %vm782 = vcmask 523264
      %783 = vst.msk [vmem:[%s226] sm:$0xff] %vm782, %v720
      %784 = vst.msk [vmem:[%s226 + $0x8] sm:$0xff] %vm782, %v723
      %785 = vst.msk [vmem:[%s226 + $0x10] sm:$0xff] %vm782, %v728
      %786 = vst.msk [vmem:[%s226 + $0x18] sm:$0xff] %vm782, %v731
      %787 = vst.msk [vmem:[%s226 + $0x20] sm:$0xff] %vm782, %v736
      %788 = vst.msk [vmem:[%s226 + $0x28] sm:$0xff] %vm782, %v739
      %789 = vst.msk [vmem:[%s226 + $0x30] sm:$0xff] %vm782, %v744
      %790 = vst.msk [vmem:[%s226 + $0x38] sm:$0xff] %vm782, %v747
      %791 = vst.msk [vmem:[%s226 + $0x40] sm:$0xff] %vm782, %v752
      %792 = vst.msk [vmem:[%s226 + $0x48] sm:$0xff] %vm782, %v755
      %793 = vst.msk [vmem:[%s226 + $0x50] sm:$0xff] %vm782, %v760
      %794 = vst.msk [vmem:[%s226 + $0x58] sm:$0xff] %vm782, %v763
      %795 = vst.msk [vmem:[%s226 + $0x60] sm:$0xff] %vm782, %v768
      %796 = vst.msk [vmem:[%s226 + $0x68] sm:$0xff] %vm782, %v771
      %797 = vst.msk [vmem:[%s226 + $0x70] sm:$0xff] %vm782, %v776
      %798 = vst.msk [vmem:[%s226 + $0x78] sm:$0xff] %vm782, %v779
      %s799 = smul.u32 16, %s16
      %p800 = scmp.lt.s32.totalorder %s799, 31
      %s801 = scalar_select %p800, %s799, 31
      %s802 = smul.addr %s801, 8
      %s803 = scalar_lea.vmem %s5, %s802
      // Predicated region
      $region41: #{deterministic_world_forward.1} parent=39 // pred_check
        %p804 = pneg %p144
      $region42: #{deterministic_world_forward.1} parent=39 // pred_check_branch
        %806 = sbr.rel (%p804) target = $region44
      $region43: #{deterministic_world_forward.1} parent=39 // pred_region
        %s807 = smul.u32 16, %s16
      $region44: #{deterministic_world_forward.1} parent=39 // pred_fallthru
        _
    $region40: #{deterministic_world_forward.1} parent=5 // pred_fallthru
      _
    %p808 = scmp.le.s32.totalorder 2, %s11
    // Predicated region
    $region45: #{deterministic_world_forward.1} parent=5 // pred_check
      %p809 = pneg %p808
    $region46: #{deterministic_world_forward.1} parent=5 // pred_check_branch
      %811 = sbr.rel (%p809) target = $region48
    $region47: #{deterministic_world_forward.1} parent=5 // pred_region
      %s812 = ssub.s32 %s11, 2
      // Predicated region
      $region49: #{deterministic_world_forward.1} parent=47 // pred_check
        %p813 = pneg %p150
      $region50: #{deterministic_world_forward.1} parent=47 // pred_check_branch
        %815 = sbr.rel (%p813) target = $region52
      $region51: #{deterministic_world_forward.1} parent=47 // pred_region
        %s816 = smul.u32 16, %s17
        %p817 = scmp.lt.s32.totalorder %s816, 31
        %s818 = scalar_select %p817, %s816, 31
        %s819 = smul.addr %s818, 8
        %s820 = scalar_lea.vmem %s5, %s819
      $region52: #{deterministic_world_forward.1} parent=47 // pred_fallthru
        _
    $region48: #{deterministic_world_forward.1} parent=5 // pred_fallthru
      _
  $region6: #{deterministic_world_forward.1} parent=0 // loop_footer
    %s15 = sadd.s32 1, %s11
  $region7: #{deterministic_world_forward.1} parent=0 // loop_footer_branch
    %10 = sbr.rel target = $region3
  $region8: #{deterministic_world_forward.1} parent=0 // loop_exit
    _

</llo_original>
